<compile_context>
chip_gen: v6e
topology: v6e:2x2x1
jax: 0.10.0
libtpu: 0.0.40
codegen_flags: <defaults>
</compile_context>

<pallas_src>
import functools

import jax
import jax.numpy as jnp
from jax.experimental import pallas as pl
from jax.experimental.pallas import tpu as pltpu

FUSED_WIDTH = 128  # lane width of every fused layer (full vreg / full MXU pass)


def _make_dueling_kernel(n_hidden_layers: int):
    """Fused dueling MLP kernel.

    Refs: x (Bt, 128) bf16, w_slab (L, 128, 128) bf16, b_slab (L, 1, 128) f32,
          head_w (128, 128) f32, head_b (1, 128) f32, out (Bt, 128) f32.
    """
    assert n_hidden_layers >= 1

    def kernel(x_ref, w_ref, b_ref, hw_ref, hb_ref, out_ref):
        h = x_ref[...]  # (Bt, 128) bf16
        act_f32 = None

        # Fused hidden stack: both branches advance together (block-diagonal
        # weights with exact-zero off-blocks keep them independent).
        for l in range(n_hidden_layers):
            z = jnp.dot(h, w_ref[l], preferred_element_type=jnp.float32) + b_ref[l]
            act_f32 = jnp.maximum(z, 0.0)          # bias + ReLU in f32 (v5e: no bf16 VALU)
            h = act_f32.astype(jnp.bfloat16)       # bf16 only as next-layer MXU input

        # Dueling combine folded into the head weights at pack time, so the
        # epilogue is a single 128-lane matmul + bias + unmasked 128-wide store
        # (no slices, no cross-lane mean, no broadcasts). Head kept in f32.
        q = jnp.dot(act_f32, hw_ref[...], preferred_element_type=jnp.float32) + hb_ref[...]
        out_ref[...] = q.astype(out_ref.dtype)

        # TODO(synk): the PyTorch forward() also print()s intermediates; debug
        # printing is omitted (it changes nothing numerically).

    return kernel


def init_params(key, state_size, action_size, hidden_layers):
    """Deterministic synthetic parameters mirroring the nn.Linear shapes.

    Returns (value_branch, adv_branch); each is a list of (W_transposed, bias)
    with W_transposed of shape (in, out) and bias of shape (1, out), f32.
    """

    def linear(k, in_f, out_f):
        k_w, k_b = jax.random.split(k)
        bound = 1.0 / jnp.sqrt(jnp.float32(in_f))
        w = jax.random.uniform(k_w, (in_f, out_f), jnp.float32, -bound, bound)
        b = jax.random.uniform(k_b, (1, out_f), jnp.float32, -bound, bound)
        return w, b

    sizes = [state_size] + list(hidden_layers)
    keys = jax.random.split(key, 2 * len(hidden_layers) + 2)
    ki = 0

    value_branch = []
    for h1, h2 in zip(sizes[:-1], sizes[1:]):
        value_branch.append(linear(keys[ki], h1, h2)); ki += 1
    value_branch.append(linear(keys[ki], hidden_layers[-1], 1)); ki += 1          # self.output

    adv_branch = []
    for h1, h2 in zip(sizes[:-1], sizes[1:]):
        adv_branch.append(linear(keys[ki], h1, h2)); ki += 1
    adv_branch.append(linear(keys[ki], hidden_layers[-1], action_size)); ki += 1  # self.dueling

    return value_branch, adv_branch


def pack_params(value_branch, adv_branch, *, state_size, action_size, hidden):
    """Pack both branches into slabs; fold the dueling combine into the head.

    Layout (fused width FW=128):
      layer 0:    rows 0..state-1 -> value W1 in cols [0,H), adv W1 in cols [H,2H)
      layers 1..: block-diagonal  value block [0:H,0:H], adv block [H:2H,H:2H)
      head (f32): Q = adv + V - mean(adv) folded:
                  rows [0:H)   cols [0,A) = w_v @ 1ᵀ
                  rows [H:2H)  cols [0,A) = W_adv @ (I - 11ᵀ/A)
                  bias lanes [0,A)        = b_adv @ (I - 11ᵀ/A) + b_v·1ᵀ
    Off-block entries are exact zeros (branches cannot leak into each other),
    and output lanes >= A are exact zeros.
    """
    L = len(value_branch) - 1          # number of fused hidden matmuls
    H = hidden
    A = action_size
    FW = FUSED_WIDTH
    assert 2 * H <= FW, "fused width must hold both branches"
    assert state_size <= FW, "state must fit in the padded lane width"
    assert A + 1 <= FW

    w_slab = jnp.zeros((L, FW, FW), jnp.float32)
    b_slab = jnp.zeros((L, 1, FW), jnp.float32)

    # Layer 0: (state -> H) for each branch, concatenated along columns.
    wv0, bv0 = value_branch[0]
    wa0, ba0 = adv_branch[0]
    w_slab = w_slab.at[0, :state_size, 0:H].set(wv0)
    w_slab = w_slab.at[0, :state_size, H:2 * H].set(wa0)
    b_slab = b_slab.at[0, 0, 0:H].set(bv0[0])
    b_slab = b_slab.at[0, 0, H:2 * H].set(ba0[0])

    # Layers 1..L-1: block-diagonal.
    for l in range(1, L):
        wv, bv = value_branch[l]
        wa, ba = adv_branch[l]
        w_slab = w_slab.at[l, 0:H, 0:H].set(wv)
        w_slab = w_slab.at[l, H:2 * H, H:2 * H].set(wa)
        b_slab = b_slab.at[l, 0, 0:H].set(bv[0])
        b_slab = b_slab.at[l, 0, H:2 * H].set(ba[0])

    # Folded dueling head (kept in f32 — no extra bf16 rounding).
    w_v, b_v = value_branch[-1]   # (H, 1), (1, 1)
    w_a, b_a = adv_branch[-1]     # (H, A), (1, A)
    C = jnp.eye(A, dtype=jnp.float32) - jnp.full((A, A), 1.0 / A, jnp.float32)
    ones_row = jnp.ones((1, A), jnp.float32)

    head_w = jnp.zeros((FW, FW), jnp.float32)
    head_b = jnp.zeros((1, FW), jnp.float32)
    head_w = head_w.at[0:H, 0:A].set(w_v @ ones_row)        # +V to every action lane
    head_w = head_w.at[H:2 * H, 0:A].set(w_a @ C)           # adv - mean(adv)
    head_b = head_b.at[0, 0:A].set((b_a @ C + b_v[0, 0] * ones_row)[0])

    return w_slab.astype(jnp.bfloat16), b_slab, head_w, head_b


def pad_states(x, state_size):
    """Zero-pad states to 128 lanes, bf16 (lanes >= state_size are exact zeros)."""
    batch = x.shape[0]
    return (jnp.zeros((batch, FUSED_WIDTH), jnp.bfloat16)
            .at[:, :state_size].set(x.astype(jnp.bfloat16)))


@functools.partial(jax.jit, static_argnames=("action_size", "n_hidden_layers", "batch_tile"))
def qnetwork_dueling_forward(x_pad, w_slab, b_slab, head_w, head_b, *,
                             action_size, n_hidden_layers, batch_tile=None):
    batch, fw = x_pad.shape
    kernel = _make_dueling_kernel(n_hidden_layers)

    # Advisory cost estimate so XLA schedules the surrounding pad/slice sensibly.
    flops = 2 * batch * fw * fw * (n_hidden_layers + 1)
    bytes_accessed = (x_pad.size * 2 + w_slab.size * 2 + b_slab.size * 4
                      + head_w.size * 4 + head_b.size * 4 + batch * fw * 4)
    cost = pl.CostEstimate(flops=flops, transcendentals=0, bytes_accessed=bytes_accessed)

    use_grid = (batch_tile is not None and batch > batch_tile
                and batch % batch_tile == 0)

    if not use_grid:
        # Gridless: whole working set (~170 KB weights + activations) in VMEM.
        out_pad = pl.pallas_call(
            kernel,
            out_shape=jax.ShapeDtypeStruct((batch, fw), jnp.float32),
            in_specs=[pl.BlockSpec(memory_space=pltpu.MemorySpace.VMEM)] * 5,
            out_specs=pl.BlockSpec(memory_space=pltpu.MemorySpace.VMEM),
            cost_estimate=cost,
        )(x_pad, w_slab, b_slab, head_w, head_b)
    else:
        # Large-batch path: 1-D parallel grid over batch tiles (shards across
        # both TensorCores on v7x). Weights use constant index_maps so they
        # stay resident across grid steps.
        out_pad = pl.pallas_call(
            kernel,
            out_shape=jax.ShapeDtypeStruct((batch, fw), jnp.float32),
            grid=(batch // batch_tile,),
            in_specs=[
                pl.BlockSpec((batch_tile, fw), lambda i: (i, 0)),
                pl.BlockSpec(w_slab.shape, lambda i: (0, 0, 0)),
                pl.BlockSpec(b_slab.shape, lambda i: (0, 0, 0)),
                pl.BlockSpec(head_w.shape, lambda i: (0, 0)),
                pl.BlockSpec(head_b.shape, lambda i: (0, 0)),
            ],
            out_specs=pl.BlockSpec((batch_tile, fw), lambda i: (i, 0)),
            compiler_params=pltpu.CompilerParams(dimension_semantics=("parallel",)),
            cost_estimate=cost,
        )(x_pad, w_slab, b_slab, head_w, head_b)

    return out_pad[:, :action_size]


def reference_forward(x, value_branch, adv_branch):
    """Pure-JAX reference matching the PyTorch forward semantics, at the same
    precision the kernel uses (bf16 hidden weights/activations, f32 accumulate,
    f32 head)."""

    def run_hidden(branch):
        h = x.astype(jnp.bfloat16)
        a = None
        for w, b in branch[:-1]:
            z = jnp.dot(h, w.astype(jnp.bfloat16),
                        preferred_element_type=jnp.float32) + b
            a = jnp.maximum(z, 0.0)
            h = a.astype(jnp.bfloat16)
        return a  # f32 activation of last hidden layer

    hv = run_hidden(value_branch)
    ha = run_hidden(adv_branch)
    w_v, b_v = value_branch[-1]
    w_a, b_a = adv_branch[-1]
    v = hv @ w_v + b_v                      # (B, 1)
    adv = ha @ w_a + b_a                    # (B, A)
    return v + adv - adv.mean(axis=1, keepdims=True)


if __name__ == "__main__":
    # Banana-navigation-like sizes: state=37, actions=4, hidden=[64]*4.
    state_size = 37
    action_size = 4
    hidden_layers = [64, 64, 64, 64]
    assert all(h == hidden_layers[0] for h in hidden_layers), "uniform hidden width expected"

    key = jax.random.PRNGKey(0)
    k_params, k_x = jax.random.split(key)

    value_branch, adv_branch = init_params(k_params, state_size, action_size, hidden_layers)
    w_slab, b_slab, head_w, head_b = pack_params(
        value_branch, adv_branch,
        state_size=state_size, action_size=action_size, hidden=hidden_layers[0],
    )

    # Batch = 128 rows: fills the MXU LHS rows and bf16 sublanes, amortizes the
    # fixed launch + 170 KB weight DMA overhead (per review).
    batch = 128
    x = jax.random.normal(k_x, (batch, state_size), jnp.float32)
    x_pad = pad_states(x, state_size)

    out = qnetwork_dueling_forward(
        x_pad, w_slab, b_slab, head_w, head_b,
        action_size=action_size, n_hidden_layers=len(hidden_layers),
    )
    out = jax.block_until_ready(out)

    ref = reference_forward(x, value_branch, adv_branch)
    assert out.shape == (batch, action_size)
    assert jnp.allclose(out, ref, atol=2e-2, rtol=2e-2), "mismatch vs JAX reference"

    # Also exercise the large-batch grid path (parallel batch axis -> 2nd TC on v7x).
    big_batch = 512
    xb = jax.random.normal(jax.random.PRNGKey(1), (big_batch, state_size), jnp.float32)
    out_b = qnetwork_dueling_forward(
        pad_states(xb, state_size), w_slab, b_slab, head_w, head_b,
        action_size=action_size, n_hidden_layers=len(hidden_layers),
        batch_tile=256,
    )
    out_b = jax.block_until_ready(out_b)
    ref_b = reference_forward(xb, value_branch, adv_branch)
    assert out_b.shape == (big_batch, action_size)
    assert jnp.allclose(out_b, ref_b, atol=2e-2, rtol=2e-2), "mismatch vs JAX reference (grid path)"

    print("KERNEL_OK")
</pallas_src>

<mosaic_0001>
module attributes {stable_mosaic.version = 11 : i64} {
  func.func @kernel(%arg0: memref<128x128xbf16, #tpu.memory_space<vmem>>, %arg1: memref<4x128x128xbf16, #tpu.memory_space<vmem>>, %arg2: memref<4x1x128xf32, #tpu.memory_space<vmem>>, %arg3: memref<128x128xf32, #tpu.memory_space<vmem>>, %arg4: memref<1x128xf32, #tpu.memory_space<vmem>>, %arg5: memref<128x128xf32, #tpu.memory_space<vmem>>) attributes {dimension_semantics = [], scalar_prefetch = 0 : i64, scratch_operands = 0 : i64, tpu.core_type = #tpu.core_type<tc>} {
    %c0 = arith.constant 0 : index
    %c0_0 = arith.constant 0 : index
    %0 = vector.load %arg0[%c0, %c0_0] : memref<128x128xbf16, #tpu.memory_space<vmem>>, vector<128x128xbf16>
    %c0_1 = arith.constant 0 : index
    %c0_2 = arith.constant 0 : index
    %c0_3 = arith.constant 0 : index
    %1 = vector.load %arg1[%c0_1, %c0_2, %c0_3] : memref<4x128x128xbf16, #tpu.memory_space<vmem>>, vector<1x128x128xbf16>
    %2 = vector.shape_cast %1 : vector<1x128x128xbf16> to vector<128x128xbf16>
    %cst = arith.constant dense<0.000000e+00> : vector<128x128xf32>
    %3 = tpu.matmul %0, %2, %cst {dimension_numbers = #tpu.dot_dimension_numbers<[1], [0], [0], [1], [0, 0, 1, 1], [], []>} : vector<128x128xbf16>, vector<128x128xbf16>, vector<128x128xf32> -> vector<128x128xf32>
    %c0_4 = arith.constant 0 : index
    %c0_5 = arith.constant 0 : index
    %c0_6 = arith.constant 0 : index
    %4 = vector.load %arg2[%c0_4, %c0_5, %c0_6] : memref<4x1x128xf32, #tpu.memory_space<vmem>>, vector<1x1x128xf32>
    %5 = vector.shape_cast %4 : vector<1x1x128xf32> to vector<1x128xf32>
    %6 = vector.broadcast %5 : vector<1x128xf32> to vector<128x128xf32>
    %7 = arith.addf %3, %6 : vector<128x128xf32>
    %cst_7 = arith.constant 0.000000e+00 : f32
    %8 = vector.broadcast %cst_7 : f32 to vector<128x128xf32>
    %9 = arith.maximumf %7, %8 : vector<128x128xf32>
    %10 = arith.truncf %9 : vector<128x128xf32> to vector<128x128xbf16>
    %c1 = arith.constant 1 : index
    %c0_8 = arith.constant 0 : index
    %c0_9 = arith.constant 0 : index
    %11 = vector.load %arg1[%c1, %c0_8, %c0_9] : memref<4x128x128xbf16, #tpu.memory_space<vmem>>, vector<1x128x128xbf16>
    %12 = vector.shape_cast %11 : vector<1x128x128xbf16> to vector<128x128xbf16>
    %cst_10 = arith.constant dense<0.000000e+00> : vector<128x128xf32>
    %13 = tpu.matmul %10, %12, %cst_10 {dimension_numbers = #tpu.dot_dimension_numbers<[1], [0], [0], [1], [0, 0, 1, 1], [], []>} : vector<128x128xbf16>, vector<128x128xbf16>, vector<128x128xf32> -> vector<128x128xf32>
    %c1_11 = arith.constant 1 : index
    %c0_12 = arith.constant 0 : index
    %c0_13 = arith.constant 0 : index
    %14 = vector.load %arg2[%c1_11, %c0_12, %c0_13] : memref<4x1x128xf32, #tpu.memory_space<vmem>>, vector<1x1x128xf32>
    %15 = vector.shape_cast %14 : vector<1x1x128xf32> to vector<1x128xf32>
    %16 = vector.broadcast %15 : vector<1x128xf32> to vector<128x128xf32>
    %17 = arith.addf %13, %16 : vector<128x128xf32>
    %cst_14 = arith.constant 0.000000e+00 : f32
    %18 = vector.broadcast %cst_14 : f32 to vector<128x128xf32>
    %19 = arith.maximumf %17, %18 : vector<128x128xf32>
    %20 = arith.truncf %19 : vector<128x128xf32> to vector<128x128xbf16>
    %c2 = arith.constant 2 : index
    %c0_15 = arith.constant 0 : index
    %c0_16 = arith.constant 0 : index
    %21 = vector.load %arg1[%c2, %c0_15, %c0_16] : memref<4x128x128xbf16, #tpu.memory_space<vmem>>, vector<1x128x128xbf16>
    %22 = vector.shape_cast %21 : vector<1x128x128xbf16> to vector<128x128xbf16>
    %cst_17 = arith.constant dense<0.000000e+00> : vector<128x128xf32>
    %23 = tpu.matmul %20, %22, %cst_17 {dimension_numbers = #tpu.dot_dimension_numbers<[1], [0], [0], [1], [0, 0, 1, 1], [], []>} : vector<128x128xbf16>, vector<128x128xbf16>, vector<128x128xf32> -> vector<128x128xf32>
    %c2_18 = arith.constant 2 : index
    %c0_19 = arith.constant 0 : index
    %c0_20 = arith.constant 0 : index
    %24 = vector.load %arg2[%c2_18, %c0_19, %c0_20] : memref<4x1x128xf32, #tpu.memory_space<vmem>>, vector<1x1x128xf32>
    %25 = vector.shape_cast %24 : vector<1x1x128xf32> to vector<1x128xf32>
    %26 = vector.broadcast %25 : vector<1x128xf32> to vector<128x128xf32>
    %27 = arith.addf %23, %26 : vector<128x128xf32>
    %cst_21 = arith.constant 0.000000e+00 : f32
    %28 = vector.broadcast %cst_21 : f32 to vector<128x128xf32>
    %29 = arith.maximumf %27, %28 : vector<128x128xf32>
    %30 = arith.truncf %29 : vector<128x128xf32> to vector<128x128xbf16>
    %c3 = arith.constant 3 : index
    %c0_22 = arith.constant 0 : index
    %c0_23 = arith.constant 0 : index
    %31 = vector.load %arg1[%c3, %c0_22, %c0_23] : memref<4x128x128xbf16, #tpu.memory_space<vmem>>, vector<1x128x128xbf16>
    %32 = vector.shape_cast %31 : vector<1x128x128xbf16> to vector<128x128xbf16>
    %cst_24 = arith.constant dense<0.000000e+00> : vector<128x128xf32>
    %33 = tpu.matmul %30, %32, %cst_24 {dimension_numbers = #tpu.dot_dimension_numbers<[1], [0], [0], [1], [0, 0, 1, 1], [], []>} : vector<128x128xbf16>, vector<128x128xbf16>, vector<128x128xf32> -> vector<128x128xf32>
    %c3_25 = arith.constant 3 : index
    %c0_26 = arith.constant 0 : index
    %c0_27 = arith.constant 0 : index
    %34 = vector.load %arg2[%c3_25, %c0_26, %c0_27] : memref<4x1x128xf32, #tpu.memory_space<vmem>>, vector<1x1x128xf32>
    %35 = vector.shape_cast %34 : vector<1x1x128xf32> to vector<1x128xf32>
    %36 = vector.broadcast %35 : vector<1x128xf32> to vector<128x128xf32>
    %37 = arith.addf %33, %36 : vector<128x128xf32>
    %cst_28 = arith.constant 0.000000e+00 : f32
    %38 = vector.broadcast %cst_28 : f32 to vector<128x128xf32>
    %39 = arith.maximumf %37, %38 : vector<128x128xf32>
    %c0_29 = arith.constant 0 : index
    %c0_30 = arith.constant 0 : index
    %40 = vector.load %arg3[%c0_29, %c0_30] : memref<128x128xf32, #tpu.memory_space<vmem>>, vector<128x128xf32>
    %cst_31 = arith.constant dense<0.000000e+00> : vector<128x128xf32>
    %41 = tpu.matmul %39, %40, %cst_31 {dimension_numbers = #tpu.dot_dimension_numbers<[1], [0], [0], [1], [0, 0, 1, 1], [], []>} : vector<128x128xf32>, vector<128x128xf32>, vector<128x128xf32> -> vector<128x128xf32>
    %c0_32 = arith.constant 0 : index
    %c0_33 = arith.constant 0 : index
    %42 = vector.load %arg4[%c0_32, %c0_33] : memref<1x128xf32, #tpu.memory_space<vmem>>, vector<1x128xf32>
    %43 = vector.broadcast %42 : vector<1x128xf32> to vector<128x128xf32>
    %44 = arith.addf %41, %43 : vector<128x128xf32>
    %c0_34 = arith.constant 0 : index
    %c0_35 = arith.constant 0 : index
    %45 = vector.load %arg5[%c0_34, %c0_35] : memref<128x128xf32, #tpu.memory_space<vmem>>, vector<128x128xf32>
    tpu.vector_store %arg5[%c0_34, %c0_35], %44 {strides = array<i32>} : memref<128x128xf32, #tpu.memory_space<vmem>>, vector<128x128xf32>,
    return
  }
}

</mosaic_0001>

<llo_original>
// kernel: qnetwork_dueling_forward.1
$region0: #{qnetwork_dueling_forward.1}
  #allocation0 [shape = 'u32[]', space=smem, size = 0x4, offset = 0x4, fixed_abs, tag = 'smem constant byte address 0x4 - core index']
  #allocation1 [shape = 'u32[144,128]{1,0:T(1,128)}', space=vmem, size = 0x12000, scoped, tag = 'internal scratch']
  %s0 = inlined_call_operand.hbm [shape: bf16[128,128], index: 0, kind: input, shape index: {}]
  %s1 = inlined_call_operand.hbm [shape: bf16[4,128,128], index: 1, kind: input, shape index: {}]
  %s2 = inlined_call_operand.hbm [shape: f32[4,1,128], index: 2, kind: input, shape index: {}]
  %s3 = inlined_call_operand.hbm [shape: f32[128,128], index: 3, kind: input, shape index: {}]
  %s4 = inlined_call_operand.vmem [shape: f32[1,128], index: 4, kind: input, shape index: {}]
  %s5 = inlined_call_operand.vmem [shape: f32[128,128], index: 5, kind: output, shape index: {}]
  %s6 = sld [smem:[#allocation0]]
  $region46: #{qnetwork_dueling_forward.1} parent=0
    _
  %s8 = ssub.s32 1, %s6
  %s9 = scalar_select 0, %s8, %s6
  $region1: #{qnetwork_dueling_forward.1} parent=0
    #allocation2 [shape = 'u8[32768]{0}', space=vmem, size = 0x8000, scoped, tag = 'input window, operand 0, single buffered']
    #allocation3 [shape = 's32[1]{0}', space=sflag, size = 0x4, scoped, tag = 'scoped memory for qnetwork_dueling_forward.1']
    #allocation4 [shape = 'u8[131072]{0}', space=vmem, size = 0x20000, scoped, tag = 'input window, operand 1, single buffered']
    #allocation5 [shape = 's32[1]{0}', space=sflag, size = 0x4, scoped, tag = 'scoped memory for qnetwork_dueling_forward.1']
    #allocation6 [shape = 'u8[2048]{0}', space=vmem, size = 0x800, scoped, tag = 'input window, operand 2, single buffered']
    #allocation7 [shape = 'u8[65536]{0}', space=vmem, size = 0x10000, scoped, tag = 'input window, operand 3, single buffered']
    #allocation8 [shape = 's32[1]{0}', space=sflag, size = 0x4, scoped, tag = 'scoped memory for qnetwork_dueling_forward.1']
    %10 = vsyncpa [#allocation3], 0
    %11 = vsyncpa [#allocation5], 0
    %12 = vsyncpa [#allocation8], 0
    // Predicated region
    $region2: #{qnetwork_dueling_forward.1} parent=1 // pred_check
      _
    $region3: #{qnetwork_dueling_forward.1} parent=1 // pred_check_branch
      %14 = sbr.rel (0) target = $region5
    $region4: #{qnetwork_dueling_forward.1} parent=1 // pred_region
      %s16 = ssub.s32 1024, 1024
      %17 = vsyncadd [#allocation3], %s16
      %s18 = sshll.u32 [#allocation2], 4
      %s19 = int_to_ptr.vmem [resolvable:$true] %s18
      %24 = dma.hbm_to_vmem [thread:$0]  %s0, 1024, %s19, [#allocation3], 64, 64, 4
    $region5: #{qnetwork_dueling_forward.1} parent=1 // pred_fallthru
      _
    // Predicated region
    $region6: #{qnetwork_dueling_forward.1} parent=1 // pred_check
      _
    $region7: #{qnetwork_dueling_forward.1} parent=1 // pred_check_branch
      %26 = sbr.rel (0) target = $region9
    $region8: #{qnetwork_dueling_forward.1} parent=1 // pred_region
      %s28 = ssub.s32 4096, 4096
      %29 = vsyncadd [#allocation5], %s28
      %s30 = sshll.u32 [#allocation4], 4
      %s31 = int_to_ptr.vmem [resolvable:$true] %s30
      %36 = dma.hbm_to_vmem [thread:$0]  %s1, 4096, %s31, [#allocation5], 64, 64, 4
    $region9: #{qnetwork_dueling_forward.1} parent=1 // pred_fallthru
      _
    // Predicated region
    $region10: #{qnetwork_dueling_forward.1} parent=1 // pred_check
      _
    $region11: #{qnetwork_dueling_forward.1} parent=1 // pred_check_branch
      %38 = sbr.rel (0) target = $region13
    $region12: #{qnetwork_dueling_forward.1} parent=1 // pred_region
      %s40 = ssub.s32 64, 64
      %41 = vsyncadd [#allocation5], %s40
      %s42 = sshll.u32 [#allocation6], 4
      %s43 = int_to_ptr.vmem [resolvable:$true] %s42
      %48 = dma.hbm_to_vmem [thread:$0]  %s2, 64, %s43, [#allocation5], 16, 16, 1
    $region13: #{qnetwork_dueling_forward.1} parent=1 // pred_fallthru
      _
    // Predicated region
    $region14: #{qnetwork_dueling_forward.1} parent=1 // pred_check
      _
    $region15: #{qnetwork_dueling_forward.1} parent=1 // pred_check_branch
      %50 = sbr.rel (0) target = $region17
    $region16: #{qnetwork_dueling_forward.1} parent=1 // pred_region
      %s52 = ssub.s32 2048, 2048
      %53 = vsyncadd [#allocation8], %s52
      %s54 = sshll.u32 [#allocation7], 4
      %s55 = int_to_ptr.vmem [resolvable:$true] %s54
      %60 = dma.hbm_to_vmem [thread:$0]  %s3, 2048, %s55, [#allocation8], 128, 128, 8
    $region17: #{qnetwork_dueling_forward.1} parent=1 // pred_fallthru
      _
    // Predicated region
    $region18: #{qnetwork_dueling_forward.1} parent=1 // pred_check
      _
    $region19: #{qnetwork_dueling_forward.1} parent=1 // pred_check_branch
      %62 = sbr.rel (0) target = $region21
    $region20: #{qnetwork_dueling_forward.1} parent=1 // pred_region
      _
    $region21: #{qnetwork_dueling_forward.1} parent=1 // pred_fallthru
      _
    // Predicated region
    $region22: #{qnetwork_dueling_forward.1} parent=1 // pred_check
      _
    $region23: #{qnetwork_dueling_forward.1} parent=1 // pred_check_branch
      %64 = sbr.rel (0) target = $region25
    $region24: #{qnetwork_dueling_forward.1} parent=1 // pred_region
      %65 = dma.done [#allocation3], 1024
    $region25: #{qnetwork_dueling_forward.1} parent=1 // pred_fallthru
      _
    // Predicated region
    $region26: #{qnetwork_dueling_forward.1} parent=1 // pred_check
      _
    $region27: #{qnetwork_dueling_forward.1} parent=1 // pred_check_branch
      %67 = sbr.rel (0) target = $region29
    $region28: #{qnetwork_dueling_forward.1} parent=1 // pred_region
      %68 = dma.done [#allocation5], 4096
    $region29: #{qnetwork_dueling_forward.1} parent=1 // pred_fallthru
      _
    // Predicated region
    $region30: #{qnetwork_dueling_forward.1} parent=1 // pred_check
      _
    $region31: #{qnetwork_dueling_forward.1} parent=1 // pred_check_branch
      %70 = sbr.rel (0) target = $region33
    $region32: #{qnetwork_dueling_forward.1} parent=1 // pred_region
      %71 = dma.done [#allocation5], 64
    $region33: #{qnetwork_dueling_forward.1} parent=1 // pred_fallthru
      _
    // Predicated region
    $region34: #{qnetwork_dueling_forward.1} parent=1 // pred_check
      _
    $region35: #{qnetwork_dueling_forward.1} parent=1 // pred_check_branch
      %73 = sbr.rel (0) target = $region37
    $region36: #{qnetwork_dueling_forward.1} parent=1 // pred_region
      %74 = dma.done [#allocation8], 2048
    $region37: #{qnetwork_dueling_forward.1} parent=1 // pred_fallthru
      _
    %v76 = vld [vmem:[#allocation2] sm:$0xf]
    %v77 = vld [vmem:[#allocation2 + $0x4] sm:$0xf]
    %v78 = vld [vmem:[#allocation2 + $0x8] sm:$0xf]
    %v79 = vld [vmem:[#allocation2 + $0xc] sm:$0xf]
    %v80 = vld [vmem:[#allocation2 + $0x10] sm:$0xf]
    %v81 = vld [vmem:[#allocation2 + $0x14] sm:$0xf]
    %v82 = vld [vmem:[#allocation2 + $0x18] sm:$0xf]
    %v83 = vld [vmem:[#allocation2 + $0x1c] sm:$0xf]
    %v84 = vld [vmem:[#allocation2 + $0x20] sm:$0xf]
    %v85 = vld [vmem:[#allocation2 + $0x24] sm:$0xf]
    %v86 = vld [vmem:[#allocation2 + $0x28] sm:$0xf]
    %v87 = vld [vmem:[#allocation2 + $0x2c] sm:$0xf]
    %v88 = vld [vmem:[#allocation2 + $0x30] sm:$0xf]
    %v89 = vld [vmem:[#allocation2 + $0x34] sm:$0xf]
    %v90 = vld [vmem:[#allocation2 + $0x38] sm:$0xf]
    %v91 = vld [vmem:[#allocation2 + $0x3c] sm:$0xf]
    %v92 = vld [vmem:[#allocation4] sm:$0xf]
    %v93 = vld [vmem:[#allocation4 + $0x4] sm:$0xf]
    %v94 = vld [vmem:[#allocation4 + $0x8] sm:$0xf]
    %v95 = vld [vmem:[#allocation4 + $0xc] sm:$0xf]
    %v96 = vld [vmem:[#allocation4 + $0x10] sm:$0xf]
    %v97 = vld [vmem:[#allocation4 + $0x14] sm:$0xf]
    %v98 = vld [vmem:[#allocation4 + $0x18] sm:$0xf]
    %v99 = vld [vmem:[#allocation4 + $0x1c] sm:$0xf]
    %v100 = vld [vmem:[#allocation4 + $0x20] sm:$0xf]
    %v101 = vld [vmem:[#allocation4 + $0x24] sm:$0xf]
    %v102 = vld [vmem:[#allocation4 + $0x28] sm:$0xf]
    %v103 = vld [vmem:[#allocation4 + $0x2c] sm:$0xf]
    %v104 = vld [vmem:[#allocation4 + $0x30] sm:$0xf]
    %v105 = vld [vmem:[#allocation4 + $0x34] sm:$0xf]
    %v106 = vld [vmem:[#allocation4 + $0x38] sm:$0xf]
    %v107 = vld [vmem:[#allocation4 + $0x3c] sm:$0xf]
    %v108 = vld [vmem:[#allocation6] sm:$0x1]
    %v110 = vlaneseq
    %v111 = vshrl.u32 %v110, 7
    %v112 = vsub.s32 0, %v111
    %v113 = vrot.slane %v108, %v112
    %v131 = vunpack.c.l.b16 %v76
    %v132 = vunpack.c.l.b16 %v77
    %v133 = vunpack.c.l.b16 %v78
    %v134 = vunpack.c.l.b16 %v79
    %v135 = vunpack.c.l.b16 %v80
    %v136 = vunpack.c.l.b16 %v81
    %v137 = vunpack.c.l.b16 %v82
    %v138 = vunpack.c.l.b16 %v83
    %v139 = vunpack.c.l.b16 %v84
    %v140 = vunpack.c.l.b16 %v85
    %v141 = vunpack.c.l.b16 %v86
    %v142 = vunpack.c.l.b16 %v87
    %v143 = vunpack.c.l.b16 %v88
    %v144 = vunpack.c.l.b16 %v89
    %v145 = vunpack.c.l.b16 %v90
    %v146 = vunpack.c.l.b16 %v91
    %v147 = vpack.c.b16 %v132, %v131
    %v148 = vpack.c.b16 %v134, %v133
    %v149 = vpack.c.b16 %v136, %v135
    %v150 = vpack.c.b16 %v138, %v137
    %v151 = vpack.c.b16 %v140, %v139
    %v152 = vpack.c.b16 %v142, %v141
    %v153 = vpack.c.b16 %v144, %v143
    %v154 = vpack.c.b16 %v146, %v145
    %v179 = vunpack.c.l.b16 %v92
    %v180 = vunpack.c.l.b16 %v93
    %v181 = vunpack.c.l.b16 %v94
    %v182 = vunpack.c.l.b16 %v95
    %v183 = vunpack.c.l.b16 %v96
    %v184 = vunpack.c.l.b16 %v97
    %v185 = vunpack.c.l.b16 %v98
    %v186 = vunpack.c.l.b16 %v99
    %v187 = vunpack.c.l.b16 %v100
    %v188 = vunpack.c.l.b16 %v101
    %v189 = vunpack.c.l.b16 %v102
    %v190 = vunpack.c.l.b16 %v103
    %v191 = vunpack.c.l.b16 %v104
    %v192 = vunpack.c.l.b16 %v105
    %v193 = vunpack.c.l.b16 %v106
    %v194 = vunpack.c.l.b16 %v107
    %v195 = vpack.c.b16 %v180, %v179
    %v196 = vpack.c.b16 %v182, %v181
    %v197 = vpack.c.b16 %v184, %v183
    %v198 = vpack.c.b16 %v186, %v185
    %v199 = vpack.c.b16 %v188, %v187
    %v200 = vpack.c.b16 %v190, %v189
    %v201 = vpack.c.b16 %v192, %v191
    %v202 = vpack.c.b16 %v194, %v193
    %211 = vmatprep.subr.bf16.mxu0 0
    %212 = vmatpush1.bf16.msra.mxu0 %v202
    %213 = vmatprep.subr.bf16.mxu0 0
    %214 = vmatpush1.bf16.msra.mxu0 %v201
    %215 = vmatprep.subr.bf16.mxu0 0
    %216 = vmatpush1.bf16.msra.mxu0 %v200
    %217 = vmatprep.subr.bf16.mxu0 0
    %218 = vmatpush1.bf16.msra.mxu0 %v199
    %219 = vmatprep.subr.bf16.mxu0 0
    %220 = vmatpush1.bf16.msra.mxu0 %v198
    %221 = vmatprep.subr.bf16.mxu0 0
    %222 = vmatpush1.bf16.msra.mxu0 %v197
    %223 = vmatprep.subr.bf16.mxu0 0
    %224 = vmatpush1.bf16.msra.mxu0 %v196
    %225 = vmatprep.subr.bf16.mxu0 0
    %226 = vmatpush1.bf16.msra.mxu0 %v195
    %227 = vmatprep.subr.bf16.mxu0 0
    %228 = vmatpush2.bf16.msra.mxu0 0
    %229 = vmatprep.subr.bf16.mxu0 0
    %230 = vmatpush2.bf16.msra.mxu0 0
    %231 = vmatprep.subr.bf16.mxu0 0
    %232 = vmatpush2.bf16.msra.mxu0 0
    %233 = vmatprep.subr.bf16.mxu0 0
    %234 = vmatpush2.bf16.msra.mxu0 0
    %235 = vmatprep.subr.bf16.mxu0 0
    %236 = vmatpush2.bf16.msra.mxu0 0
    %237 = vmatprep.subr.bf16.mxu0 0
    %238 = vmatpush2.bf16.msra.mxu0 0
    %239 = vmatprep.subr.bf16.mxu0 0
    %240 = vmatpush2.bf16.msra.mxu0 0
    %241 = vmatprep.subr.bf16.mxu0 0
    %242 = vmatpush2.bf16.msra.mxu0 0
    %243 = vmatprep.mubr.bf16.mxu0 0
    %244 = vmatmul.mubr.bf16.gmra.mxu0 %v147
    %v245 = vpop.f32.mrf.mxu0
    %v246 = vadd.f32 %v113, %v245
    %v247 = vpop.f32.mrf.mxu0
    %v248 = vpop.f32.mrf.mxu0
    %v249 = vadd.f32 %v113, %v248
    %v250 = vpop.f32.mrf.mxu0
    %251 = vmatprep.mubr.bf16.mxu0 0
    %252 = vmatmul.mubr.bf16.gmra.mxu0 %v148
    %v253 = vpop.f32.mrf.mxu0
    %v254 = vadd.f32 %v113, %v253
    %v255 = vpop.f32.mrf.mxu0
    %v256 = vpop.f32.mrf.mxu0
    %v257 = vadd.f32 %v113, %v256
    %v258 = vpop.f32.mrf.mxu0
    %259 = vmatprep.mubr.bf16.mxu0 0
    %260 = vmatmul.mubr.bf16.gmra.mxu0 %v149
    %v261 = vpop.f32.mrf.mxu0
    %v262 = vadd.f32 %v113, %v261
    %v263 = vpop.f32.mrf.mxu0
    %v264 = vpop.f32.mrf.mxu0
    %v265 = vadd.f32 %v113, %v264
    %v266 = vpop.f32.mrf.mxu0
    %267 = vmatprep.mubr.bf16.mxu0 0
    %268 = vmatmul.mubr.bf16.gmra.mxu0 %v150
    %v269 = vpop.f32.mrf.mxu0
    %v270 = vadd.f32 %v113, %v269
    %v271 = vpop.f32.mrf.mxu0
    %v272 = vpop.f32.mrf.mxu0
    %v273 = vadd.f32 %v113, %v272
    %v274 = vpop.f32.mrf.mxu0
    %275 = vmatprep.mubr.bf16.mxu0 0
    %276 = vmatmul.mubr.bf16.gmra.mxu0 %v151
    %v277 = vpop.f32.mrf.mxu0
    %v278 = vadd.f32 %v113, %v277
    %v279 = vpop.f32.mrf.mxu0
    %v280 = vpop.f32.mrf.mxu0
    %v281 = vadd.f32 %v113, %v280
    %v282 = vpop.f32.mrf.mxu0
    %283 = vmatprep.mubr.bf16.mxu0 0
    %284 = vmatmul.mubr.bf16.gmra.mxu0 %v152
    %v285 = vpop.f32.mrf.mxu0
    %v286 = vadd.f32 %v113, %v285
    %v287 = vpop.f32.mrf.mxu0
    %v288 = vpop.f32.mrf.mxu0
    %v289 = vadd.f32 %v113, %v288
    %v290 = vpop.f32.mrf.mxu0
    %291 = vmatprep.mubr.bf16.mxu0 0
    %292 = vmatmul.mubr.bf16.gmra.mxu0 %v153
    %v293 = vpop.f32.mrf.mxu0
    %v294 = vadd.f32 %v113, %v293
    %v295 = vpop.f32.mrf.mxu0
    %v296 = vpop.f32.mrf.mxu0
    %v297 = vadd.f32 %v113, %v296
    %v298 = vpop.f32.mrf.mxu0
    %299 = vmatprep.mubr.bf16.mxu0 0
    %300 = vmatmul.mubr.bf16.gmra.mxu0 %v154
    %v301 = vpop.f32.mrf.mxu0
    %v302 = vadd.f32 %v113, %v301
    %v303 = vpop.f32.mrf.mxu0
    %v304 = vpop.f32.mrf.mxu0
    %v305 = vadd.f32 %v113, %v304
    %v306 = vpop.f32.mrf.mxu0
    %307 = vdwg.mxu0
    %v308 = vmax.f32 %v246, 0.0
    %v309 = vmax.f32 %v249, 0.0
    %v310 = vmax.f32 %v254, 0.0
    %v311 = vmax.f32 %v257, 0.0
    %v312 = vmax.f32 %v262, 0.0
    %v313 = vmax.f32 %v265, 0.0
    %v314 = vmax.f32 %v270, 0.0
    %v315 = vmax.f32 %v273, 0.0
    %v316 = vmax.f32 %v278, 0.0
    %v317 = vmax.f32 %v281, 0.0
    %v318 = vmax.f32 %v286, 0.0
    %v319 = vmax.f32 %v289, 0.0
    %v320 = vmax.f32 %v294, 0.0
    %v321 = vmax.f32 %v297, 0.0
    %v322 = vmax.f32 %v302, 0.0
    %v323 = vmax.f32 %v305, 0.0
    %v324 = vpack.c.bf16 %v309, %v308
    %v325 = vpack.c.bf16 %v311, %v310
    %v326 = vpack.c.bf16 %v313, %v312
    %v327 = vpack.c.bf16 %v315, %v314
    %v328 = vpack.c.bf16 %v317, %v316
    %v329 = vpack.c.bf16 %v319, %v318
    %v330 = vpack.c.bf16 %v321, %v320
    %v331 = vpack.c.bf16 %v323, %v322
    %s332 = scalar_lea.vmem [#allocation4], 64
    %v333 = vld [vmem:[%s332] sm:$0xf]
    %v334 = vld [vmem:[%s332 + $0x4] sm:$0xf]
    %v335 = vld [vmem:[%s332 + $0x8] sm:$0xf]
    %v336 = vld [vmem:[%s332 + $0xc] sm:$0xf]
    %v337 = vld [vmem:[%s332 + $0x10] sm:$0xf]
    %v338 = vld [vmem:[%s332 + $0x14] sm:$0xf]
    %v339 = vld [vmem:[%s332 + $0x18] sm:$0xf]
    %v340 = vld [vmem:[%s332 + $0x1c] sm:$0xf]
    %v341 = vld [vmem:[%s332 + $0x20] sm:$0xf]
    %v342 = vld [vmem:[%s332 + $0x24] sm:$0xf]
    %v343 = vld [vmem:[%s332 + $0x28] sm:$0xf]
    %v344 = vld [vmem:[%s332 + $0x2c] sm:$0xf]
    %v345 = vld [vmem:[%s332 + $0x30] sm:$0xf]
    %v346 = vld [vmem:[%s332 + $0x34] sm:$0xf]
    %v347 = vld [vmem:[%s332 + $0x38] sm:$0xf]
    %v348 = vld [vmem:[%s332 + $0x3c] sm:$0xf]
    %s349 = scalar_lea.vmem [#allocation6], 1
    %v350 = vld [vmem:[%s349] sm:$0x1]
    %v352 = vlaneseq
    %v353 = vshrl.u32 %v352, 7
    %v354 = vsub.s32 0, %v353
    %v355 = vrot.slane %v350, %v354
    %v373 = vunpack.c.l.b16 %v333
    %v374 = vunpack.c.l.b16 %v334
    %v375 = vunpack.c.l.b16 %v335
    %v376 = vunpack.c.l.b16 %v336
    %v377 = vunpack.c.l.b16 %v337
    %v378 = vunpack.c.l.b16 %v338
    %v379 = vunpack.c.l.b16 %v339
    %v380 = vunpack.c.l.b16 %v340
    %v381 = vunpack.c.l.b16 %v341
    %v382 = vunpack.c.l.b16 %v342
    %v383 = vunpack.c.l.b16 %v343
    %v384 = vunpack.c.l.b16 %v344
    %v385 = vunpack.c.l.b16 %v345
    %v386 = vunpack.c.l.b16 %v346
    %v387 = vunpack.c.l.b16 %v347
    %v388 = vunpack.c.l.b16 %v348
    %v389 = vpack.c.b16 %v374, %v373
    %v390 = vpack.c.b16 %v376, %v375
    %v391 = vpack.c.b16 %v378, %v377
    %v392 = vpack.c.b16 %v380, %v379
    %v393 = vpack.c.b16 %v382, %v381
    %v394 = vpack.c.b16 %v384, %v383
    %v395 = vpack.c.b16 %v386, %v385
    %v396 = vpack.c.b16 %v388, %v387
    %405 = vmatprep.subr.bf16.mxu0 0
    %406 = vmatpush1.bf16.msra.mxu0 %v396
    %407 = vmatprep.subr.bf16.mxu0 0
    %408 = vmatpush1.bf16.msra.mxu0 %v395
    %409 = vmatprep.subr.bf16.mxu0 0
    %410 = vmatpush1.bf16.msra.mxu0 %v394
    %411 = vmatprep.subr.bf16.mxu0 0
    %412 = vmatpush1.bf16.msra.mxu0 %v393
    %413 = vmatprep.subr.bf16.mxu0 0
    %414 = vmatpush1.bf16.msra.mxu0 %v392
    %415 = vmatprep.subr.bf16.mxu0 0
    %416 = vmatpush1.bf16.msra.mxu0 %v391
    %417 = vmatprep.subr.bf16.mxu0 0
    %418 = vmatpush1.bf16.msra.mxu0 %v390
    %419 = vmatprep.subr.bf16.mxu0 0
    %420 = vmatpush1.bf16.msra.mxu0 %v389
    %421 = vmatprep.subr.bf16.mxu0 0
    %422 = vmatpush2.bf16.msra.mxu0 0
    %423 = vmatprep.subr.bf16.mxu0 0
    %424 = vmatpush2.bf16.msra.mxu0 0
    %425 = vmatprep.subr.bf16.mxu0 0
    %426 = vmatpush2.bf16.msra.mxu0 0
    %427 = vmatprep.subr.bf16.mxu0 0
    %428 = vmatpush2.bf16.msra.mxu0 0
    %429 = vmatprep.subr.bf16.mxu0 0
    %430 = vmatpush2.bf16.msra.mxu0 0
    %431 = vmatprep.subr.bf16.mxu0 0
    %432 = vmatpush2.bf16.msra.mxu0 0
    %433 = vmatprep.subr.bf16.mxu0 0
    %434 = vmatpush2.bf16.msra.mxu0 0
    %435 = vmatprep.subr.bf16.mxu0 0
    %436 = vmatpush2.bf16.msra.mxu0 0
    %437 = vmatprep.mubr.bf16.mxu0 0
    %438 = vmatmul.mubr.bf16.gmra.mxu0 %v324
    %v439 = vpop.f32.mrf.mxu0
    %v440 = vadd.f32 %v355, %v439
    %v441 = vpop.f32.mrf.mxu0
    %v442 = vpop.f32.mrf.mxu0
    %v443 = vadd.f32 %v355, %v442
    %v444 = vpop.f32.mrf.mxu0
    %445 = vmatprep.mubr.bf16.mxu0 0
    %446 = vmatmul.mubr.bf16.gmra.mxu0 %v325
    %v447 = vpop.f32.mrf.mxu0
    %v448 = vadd.f32 %v355, %v447
    %v449 = vpop.f32.mrf.mxu0
    %v450 = vpop.f32.mrf.mxu0
    %v451 = vadd.f32 %v355, %v450
    %v452 = vpop.f32.mrf.mxu0
    %453 = vmatprep.mubr.bf16.mxu0 0
    %454 = vmatmul.mubr.bf16.gmra.mxu0 %v326
    %v455 = vpop.f32.mrf.mxu0
    %v456 = vadd.f32 %v355, %v455
    %v457 = vpop.f32.mrf.mxu0
    %v458 = vpop.f32.mrf.mxu0
    %v459 = vadd.f32 %v355, %v458
    %v460 = vpop.f32.mrf.mxu0
    %461 = vmatprep.mubr.bf16.mxu0 0
    %462 = vmatmul.mubr.bf16.gmra.mxu0 %v327
    %v463 = vpop.f32.mrf.mxu0
    %v464 = vadd.f32 %v355, %v463
    %v465 = vpop.f32.mrf.mxu0
    %v466 = vpop.f32.mrf.mxu0
    %v467 = vadd.f32 %v355, %v466
    %v468 = vpop.f32.mrf.mxu0
    %469 = vmatprep.mubr.bf16.mxu0 0
    %470 = vmatmul.mubr.bf16.gmra.mxu0 %v328
    %v471 = vpop.f32.mrf.mxu0
    %v472 = vadd.f32 %v355, %v471
    %v473 = vpop.f32.mrf.mxu0
    %v474 = vpop.f32.mrf.mxu0
    %v475 = vadd.f32 %v355, %v474
    %v476 = vpop.f32.mrf.mxu0
    %477 = vmatprep.mubr.bf16.mxu0 0
    %478 = vmatmul.mubr.bf16.gmra.mxu0 %v329
    %v479 = vpop.f32.mrf.mxu0
    %v480 = vadd.f32 %v355, %v479
    %v481 = vpop.f32.mrf.mxu0
    %v482 = vpop.f32.mrf.mxu0
    %v483 = vadd.f32 %v355, %v482
    %v484 = vpop.f32.mrf.mxu0
    %485 = vmatprep.mubr.bf16.mxu0 0
    %486 = vmatmul.mubr.bf16.gmra.mxu0 %v330
    %v487 = vpop.f32.mrf.mxu0
    %v488 = vadd.f32 %v355, %v487
    %v489 = vpop.f32.mrf.mxu0
    %v490 = vpop.f32.mrf.mxu0
    %v491 = vadd.f32 %v355, %v490
    %v492 = vpop.f32.mrf.mxu0
    %493 = vmatprep.mubr.bf16.mxu0 0
    %494 = vmatmul.mubr.bf16.gmra.mxu0 %v331
    %v495 = vpop.f32.mrf.mxu0
    %v496 = vadd.f32 %v355, %v495
    %v497 = vpop.f32.mrf.mxu0
    %v498 = vpop.f32.mrf.mxu0
    %v499 = vadd.f32 %v355, %v498
    %v500 = vpop.f32.mrf.mxu0
    %501 = vdwg.mxu0
    %v502 = vmax.f32 %v440, 0.0
    %v503 = vmax.f32 %v443, 0.0
    %v504 = vmax.f32 %v448, 0.0
    %v505 = vmax.f32 %v451, 0.0
    %v506 = vmax.f32 %v456, 0.0
    %v507 = vmax.f32 %v459, 0.0
    %v508 = vmax.f32 %v464, 0.0
    %v509 = vmax.f32 %v467, 0.0
    %v510 = vmax.f32 %v472, 0.0
    %v511 = vmax.f32 %v475, 0.0
    %v512 = vmax.f32 %v480, 0.0
    %v513 = vmax.f32 %v483, 0.0
    %v514 = vmax.f32 %v488, 0.0
    %v515 = vmax.f32 %v491, 0.0
    %v516 = vmax.f32 %v496, 0.0
    %v517 = vmax.f32 %v499, 0.0
    %v518 = vpack.c.bf16 %v503, %v502
    %v519 = vpack.c.bf16 %v505, %v504
    %v520 = vpack.c.bf16 %v507, %v506
    %v521 = vpack.c.bf16 %v509, %v508
    %v522 = vpack.c.bf16 %v511, %v510
    %v523 = vpack.c.bf16 %v513, %v512
    %v524 = vpack.c.bf16 %v515, %v514
    %v525 = vpack.c.bf16 %v517, %v516
    %s526 = scalar_lea.vmem [#allocation4], 128
    %v527 = vld [vmem:[%s526] sm:$0xf]
    %v528 = vld [vmem:[%s526 + $0x4] sm:$0xf]
    %v529 = vld [vmem:[%s526 + $0x8] sm:$0xf]
    %v530 = vld [vmem:[%s526 + $0xc] sm:$0xf]
    %v531 = vld [vmem:[%s526 + $0x10] sm:$0xf]
    %v532 = vld [vmem:[%s526 + $0x14] sm:$0xf]
    %v533 = vld [vmem:[%s526 + $0x18] sm:$0xf]
    %v534 = vld [vmem:[%s526 + $0x1c] sm:$0xf]
    %v535 = vld [vmem:[%s526 + $0x20] sm:$0xf]
    %v536 = vld [vmem:[%s526 + $0x24] sm:$0xf]
    %v537 = vld [vmem:[%s526 + $0x28] sm:$0xf]
    %v538 = vld [vmem:[%s526 + $0x2c] sm:$0xf]
    %v539 = vld [vmem:[%s526 + $0x30] sm:$0xf]
    %v540 = vld [vmem:[%s526 + $0x34] sm:$0xf]
    %v541 = vld [vmem:[%s526 + $0x38] sm:$0xf]
    %v542 = vld [vmem:[%s526 + $0x3c] sm:$0xf]
    %s543 = scalar_lea.vmem [#allocation6], 2
    %v544 = vld [vmem:[%s543] sm:$0x1]
    %v546 = vlaneseq
    %v547 = vshrl.u32 %v546, 7
    %v548 = vsub.s32 0, %v547
    %v549 = vrot.slane %v544, %v548
    %v567 = vunpack.c.l.b16 %v527
    %v568 = vunpack.c.l.b16 %v528
    %v569 = vunpack.c.l.b16 %v529
    %v570 = vunpack.c.l.b16 %v530
    %v571 = vunpack.c.l.b16 %v531
    %v572 = vunpack.c.l.b16 %v532
    %v573 = vunpack.c.l.b16 %v533
    %v574 = vunpack.c.l.b16 %v534
    %v575 = vunpack.c.l.b16 %v535
    %v576 = vunpack.c.l.b16 %v536
    %v577 = vunpack.c.l.b16 %v537
    %v578 = vunpack.c.l.b16 %v538
    %v579 = vunpack.c.l.b16 %v539
    %v580 = vunpack.c.l.b16 %v540
    %v581 = vunpack.c.l.b16 %v541
    %v582 = vunpack.c.l.b16 %v542
    %v583 = vpack.c.b16 %v568, %v567
    %v584 = vpack.c.b16 %v570, %v569
    %v585 = vpack.c.b16 %v572, %v571
    %v586 = vpack.c.b16 %v574, %v573
    %v587 = vpack.c.b16 %v576, %v575
    %v588 = vpack.c.b16 %v578, %v577
    %v589 = vpack.c.b16 %v580, %v579
    %v590 = vpack.c.b16 %v582, %v581
    %599 = vmatprep.subr.bf16.mxu0 0
    %600 = vmatpush1.bf16.msra.mxu0 %v590
    %601 = vmatprep.subr.bf16.mxu0 0
    %602 = vmatpush1.bf16.msra.mxu0 %v589
    %603 = vmatprep.subr.bf16.mxu0 0
    %604 = vmatpush1.bf16.msra.mxu0 %v588
    %605 = vmatprep.subr.bf16.mxu0 0
    %606 = vmatpush1.bf16.msra.mxu0 %v587
    %607 = vmatprep.subr.bf16.mxu0 0
    %608 = vmatpush1.bf16.msra.mxu0 %v586
    %609 = vmatprep.subr.bf16.mxu0 0
    %610 = vmatpush1.bf16.msra.mxu0 %v585
    %611 = vmatprep.subr.bf16.mxu0 0
    %612 = vmatpush1.bf16.msra.mxu0 %v584
    %613 = vmatprep.subr.bf16.mxu0 0
    %614 = vmatpush1.bf16.msra.mxu0 %v583
    %615 = vmatprep.subr.bf16.mxu0 0
    %616 = vmatpush2.bf16.msra.mxu0 0
    %617 = vmatprep.subr.bf16.mxu0 0
    %618 = vmatpush2.bf16.msra.mxu0 0
    %619 = vmatprep.subr.bf16.mxu0 0
    %620 = vmatpush2.bf16.msra.mxu0 0
    %621 = vmatprep.subr.bf16.mxu0 0
    %622 = vmatpush2.bf16.msra.mxu0 0
    %623 = vmatprep.subr.bf16.mxu0 0
    %624 = vmatpush2.bf16.msra.mxu0 0
    %625 = vmatprep.subr.bf16.mxu0 0
    %626 = vmatpush2.bf16.msra.mxu0 0
    %627 = vmatprep.subr.bf16.mxu0 0
    %628 = vmatpush2.bf16.msra.mxu0 0
    %629 = vmatprep.subr.bf16.mxu0 0
    %630 = vmatpush2.bf16.msra.mxu0 0
    %631 = vmatprep.mubr.bf16.mxu0 0
    %632 = vmatmul.mubr.bf16.gmra.mxu0 %v518
    %v633 = vpop.f32.mrf.mxu0
    %v634 = vadd.f32 %v549, %v633
    %v635 = vpop.f32.mrf.mxu0
    %v636 = vpop.f32.mrf.mxu0
    %v637 = vadd.f32 %v549, %v636
    %v638 = vpop.f32.mrf.mxu0
    %639 = vmatprep.mubr.bf16.mxu0 0
    %640 = vmatmul.mubr.bf16.gmra.mxu0 %v519
    %v641 = vpop.f32.mrf.mxu0
    %v642 = vadd.f32 %v549, %v641
    %v643 = vpop.f32.mrf.mxu0
    %v644 = vpop.f32.mrf.mxu0
    %v645 = vadd.f32 %v549, %v644
    %v646 = vpop.f32.mrf.mxu0
    %647 = vmatprep.mubr.bf16.mxu0 0
    %648 = vmatmul.mubr.bf16.gmra.mxu0 %v520
    %v649 = vpop.f32.mrf.mxu0
    %v650 = vadd.f32 %v549, %v649
    %v651 = vpop.f32.mrf.mxu0
    %v652 = vpop.f32.mrf.mxu0
    %v653 = vadd.f32 %v549, %v652
    %v654 = vpop.f32.mrf.mxu0
    %655 = vmatprep.mubr.bf16.mxu0 0
    %656 = vmatmul.mubr.bf16.gmra.mxu0 %v521
    %v657 = vpop.f32.mrf.mxu0
    %v658 = vadd.f32 %v549, %v657
    %v659 = vpop.f32.mrf.mxu0
    %v660 = vpop.f32.mrf.mxu0
    %v661 = vadd.f32 %v549, %v660
    %v662 = vpop.f32.mrf.mxu0
    %663 = vmatprep.mubr.bf16.mxu0 0
    %664 = vmatmul.mubr.bf16.gmra.mxu0 %v522
    %v665 = vpop.f32.mrf.mxu0
    %v666 = vadd.f32 %v549, %v665
    %v667 = vpop.f32.mrf.mxu0
    %v668 = vpop.f32.mrf.mxu0
    %v669 = vadd.f32 %v549, %v668
    %v670 = vpop.f32.mrf.mxu0
    %671 = vmatprep.mubr.bf16.mxu0 0
    %672 = vmatmul.mubr.bf16.gmra.mxu0 %v523
    %v673 = vpop.f32.mrf.mxu0
    %v674 = vadd.f32 %v549, %v673
    %v675 = vpop.f32.mrf.mxu0
    %v676 = vpop.f32.mrf.mxu0
    %v677 = vadd.f32 %v549, %v676
    %v678 = vpop.f32.mrf.mxu0
    %679 = vmatprep.mubr.bf16.mxu0 0
    %680 = vmatmul.mubr.bf16.gmra.mxu0 %v524
    %v681 = vpop.f32.mrf.mxu0
    %v682 = vadd.f32 %v549, %v681
    %v683 = vpop.f32.mrf.mxu0
    %v684 = vpop.f32.mrf.mxu0
    %v685 = vadd.f32 %v549, %v684
    %v686 = vpop.f32.mrf.mxu0
    %687 = vmatprep.mubr.bf16.mxu0 0
    %688 = vmatmul.mubr.bf16.gmra.mxu0 %v525
    %v689 = vpop.f32.mrf.mxu0
    %v690 = vadd.f32 %v549, %v689
    %v691 = vpop.f32.mrf.mxu0
    %v692 = vpop.f32.mrf.mxu0
    %v693 = vadd.f32 %v549, %v692
    %v694 = vpop.f32.mrf.mxu0
    %695 = vdwg.mxu0
    %v696 = vmax.f32 %v634, 0.0
    %v697 = vmax.f32 %v637, 0.0
    %v698 = vmax.f32 %v642, 0.0
    %v699 = vmax.f32 %v645, 0.0
    %v700 = vmax.f32 %v650, 0.0
    %v701 = vmax.f32 %v653, 0.0
    %v702 = vmax.f32 %v658, 0.0
    %v703 = vmax.f32 %v661, 0.0
    %v704 = vmax.f32 %v666, 0.0
    %v705 = vmax.f32 %v669, 0.0
    %v706 = vmax.f32 %v674, 0.0
    %v707 = vmax.f32 %v677, 0.0
    %v708 = vmax.f32 %v682, 0.0
    %v709 = vmax.f32 %v685, 0.0
    %v710 = vmax.f32 %v690, 0.0
    %v711 = vmax.f32 %v693, 0.0
    %v712 = vpack.c.bf16 %v697, %v696
    %v713 = vpack.c.bf16 %v699, %v698
    %v714 = vpack.c.bf16 %v701, %v700
    %v715 = vpack.c.bf16 %v703, %v702
    %v716 = vpack.c.bf16 %v705, %v704
    %v717 = vpack.c.bf16 %v707, %v706
    %v718 = vpack.c.bf16 %v709, %v708
    %v719 = vpack.c.bf16 %v711, %v710
    %s720 = scalar_lea.vmem [#allocation4], 192
    %v721 = vld [vmem:[%s720] sm:$0xf]
    %v722 = vld [vmem:[%s720 + $0x4] sm:$0xf]
    %v723 = vld [vmem:[%s720 + $0x8] sm:$0xf]
    %v724 = vld [vmem:[%s720 + $0xc] sm:$0xf]
    %v725 = vld [vmem:[%s720 + $0x10] sm:$0xf]
    %v726 = vld [vmem:[%s720 + $0x14] sm:$0xf]
    %v727 = vld [vmem:[%s720 + $0x18] sm:$0xf]
    %v728 = vld [vmem:[%s720 + $0x1c] sm:$0xf]
    %v729 = vld [vmem:[%s720 + $0x20] sm:$0xf]
    %v730 = vld [vmem:[%s720 + $0x24] sm:$0xf]
    %v731 = vld [vmem:[%s720 + $0x28] sm:$0xf]
    %v732 = vld [vmem:[%s720 + $0x2c] sm:$0xf]
    %v733 = vld [vmem:[%s720 + $0x30] sm:$0xf]
    %v734 = vld [vmem:[%s720 + $0x34] sm:$0xf]
    %v735 = vld [vmem:[%s720 + $0x38] sm:$0xf]
    %v736 = vld [vmem:[%s720 + $0x3c] sm:$0xf]
    %s737 = scalar_lea.vmem [#allocation6], 3
    %v738 = vld [vmem:[%s737] sm:$0x1]
    %v740 = vlaneseq
    %v741 = vshrl.u32 %v740, 7
    %v742 = vsub.s32 0, %v741
    %v743 = vrot.slane %v738, %v742
    %v761 = vunpack.c.l.b16 %v721
    %v762 = vunpack.c.l.b16 %v722
    %v763 = vunpack.c.l.b16 %v723
    %v764 = vunpack.c.l.b16 %v724
    %v765 = vunpack.c.l.b16 %v725
    %v766 = vunpack.c.l.b16 %v726
    %v767 = vunpack.c.l.b16 %v727
    %v768 = vunpack.c.l.b16 %v728
    %v769 = vunpack.c.l.b16 %v729
    %v770 = vunpack.c.l.b16 %v730
    %v771 = vunpack.c.l.b16 %v731
    %v772 = vunpack.c.l.b16 %v732
    %v773 = vunpack.c.l.b16 %v733
    %v774 = vunpack.c.l.b16 %v734
    %v775 = vunpack.c.l.b16 %v735
    %v776 = vunpack.c.l.b16 %v736
    %v777 = vpack.c.b16 %v762, %v761
    %v778 = vpack.c.b16 %v764, %v763
    %v779 = vpack.c.b16 %v766, %v765
    %v780 = vpack.c.b16 %v768, %v767
    %v781 = vpack.c.b16 %v770, %v769
    %v782 = vpack.c.b16 %v772, %v771
    %v783 = vpack.c.b16 %v774, %v773
    %v784 = vpack.c.b16 %v776, %v775
    %793 = vmatprep.subr.bf16.mxu0 0
    %794 = vmatpush1.bf16.msra.mxu0 %v784
    %795 = vmatprep.subr.bf16.mxu0 0
    %796 = vmatpush1.bf16.msra.mxu0 %v783
    %797 = vmatprep.subr.bf16.mxu0 0
    %798 = vmatpush1.bf16.msra.mxu0 %v782
    %799 = vmatprep.subr.bf16.mxu0 0
    %800 = vmatpush1.bf16.msra.mxu0 %v781
    %801 = vmatprep.subr.bf16.mxu0 0
    %802 = vmatpush1.bf16.msra.mxu0 %v780
    %803 = vmatprep.subr.bf16.mxu0 0
    %804 = vmatpush1.bf16.msra.mxu0 %v779
    %805 = vmatprep.subr.bf16.mxu0 0
    %806 = vmatpush1.bf16.msra.mxu0 %v778
    %807 = vmatprep.subr.bf16.mxu0 0
    %808 = vmatpush1.bf16.msra.mxu0 %v777
    %809 = vmatprep.subr.bf16.mxu0 0
    %810 = vmatpush2.bf16.msra.mxu0 0
    %811 = vmatprep.subr.bf16.mxu0 0
    %812 = vmatpush2.bf16.msra.mxu0 0
    %813 = vmatprep.subr.bf16.mxu0 0
    %814 = vmatpush2.bf16.msra.mxu0 0
    %815 = vmatprep.subr.bf16.mxu0 0
    %816 = vmatpush2.bf16.msra.mxu0 0
    %817 = vmatprep.subr.bf16.mxu0 0
    %818 = vmatpush2.bf16.msra.mxu0 0
    %819 = vmatprep.subr.bf16.mxu0 0
    %820 = vmatpush2.bf16.msra.mxu0 0
    %821 = vmatprep.subr.bf16.mxu0 0
    %822 = vmatpush2.bf16.msra.mxu0 0
    %823 = vmatprep.subr.bf16.mxu0 0
    %824 = vmatpush2.bf16.msra.mxu0 0
    %825 = vmatprep.mubr.bf16.mxu0 0
    %826 = vmatmul.mubr.bf16.gmra.mxu0 %v712
    %v827 = vpop.f32.mrf.mxu0
    %v828 = vadd.f32 %v743, %v827
    %v829 = vpop.f32.mrf.mxu0
    %v830 = vpop.f32.mrf.mxu0
    %v831 = vadd.f32 %v743, %v830
    %v832 = vpop.f32.mrf.mxu0
    %833 = vmatprep.mubr.bf16.mxu0 0
    %834 = vmatmul.mubr.bf16.gmra.mxu0 %v713
    %v835 = vpop.f32.mrf.mxu0
    %v836 = vadd.f32 %v743, %v835
    %v837 = vpop.f32.mrf.mxu0
    %v838 = vpop.f32.mrf.mxu0
    %v839 = vadd.f32 %v743, %v838
    %v840 = vpop.f32.mrf.mxu0
    %841 = vmatprep.mubr.bf16.mxu0 0
    %842 = vmatmul.mubr.bf16.gmra.mxu0 %v714
    %v843 = vpop.f32.mrf.mxu0
    %v844 = vadd.f32 %v743, %v843
    %v845 = vpop.f32.mrf.mxu0
    %v846 = vpop.f32.mrf.mxu0
    %v847 = vadd.f32 %v743, %v846
    %v848 = vpop.f32.mrf.mxu0
    %849 = vmatprep.mubr.bf16.mxu0 0
    %850 = vmatmul.mubr.bf16.gmra.mxu0 %v715
    %v851 = vpop.f32.mrf.mxu0
    %v852 = vadd.f32 %v743, %v851
    %v853 = vpop.f32.mrf.mxu0
    %v854 = vpop.f32.mrf.mxu0
    %v855 = vadd.f32 %v743, %v854
    %v856 = vpop.f32.mrf.mxu0
    %857 = vmatprep.mubr.bf16.mxu0 0
    %858 = vmatmul.mubr.bf16.gmra.mxu0 %v716
    %v859 = vpop.f32.mrf.mxu0
    %v860 = vadd.f32 %v743, %v859
    %v861 = vpop.f32.mrf.mxu0
    %v862 = vpop.f32.mrf.mxu0
    %v863 = vadd.f32 %v743, %v862
    %v864 = vpop.f32.mrf.mxu0
    %865 = vmatprep.mubr.bf16.mxu0 0
    %866 = vmatmul.mubr.bf16.gmra.mxu0 %v717
    %v867 = vpop.f32.mrf.mxu0
    %v868 = vadd.f32 %v743, %v867
    %v869 = vpop.f32.mrf.mxu0
    %v870 = vpop.f32.mrf.mxu0
    %v871 = vadd.f32 %v743, %v870
    %v872 = vpop.f32.mrf.mxu0
    %873 = vmatprep.mubr.bf16.mxu0 0
    %874 = vmatmul.mubr.bf16.gmra.mxu0 %v718
    %v875 = vpop.f32.mrf.mxu0
    %v876 = vadd.f32 %v743, %v875
    %v877 = vpop.f32.mrf.mxu0
    %v878 = vpop.f32.mrf.mxu0
    %v879 = vadd.f32 %v743, %v878
    %v880 = vpop.f32.mrf.mxu0
    %881 = vmatprep.mubr.bf16.mxu0 0
    %882 = vmatmul.mubr.bf16.gmra.mxu0 %v719
    %v883 = vpop.f32.mrf.mxu0
    %v884 = vadd.f32 %v743, %v883
    %v885 = vpop.f32.mrf.mxu0
    %v886 = vpop.f32.mrf.mxu0
    %v887 = vadd.f32 %v743, %v886
    %v888 = vpop.f32.mrf.mxu0
    %889 = vdwg.mxu0
    %v890 = vmax.f32 %v828, 0.0
    %v891 = vmax.f32 %v831, 0.0
    %v892 = vmax.f32 %v836, 0.0
    %v893 = vmax.f32 %v839, 0.0
    %v894 = vmax.f32 %v844, 0.0
    %v895 = vmax.f32 %v847, 0.0
    %v896 = vmax.f32 %v852, 0.0
    %v897 = vmax.f32 %v855, 0.0
    %v898 = vmax.f32 %v860, 0.0
    %v899 = vmax.f32 %v863, 0.0
    %v900 = vmax.f32 %v868, 0.0
    %v901 = vmax.f32 %v871, 0.0
    %v902 = vmax.f32 %v876, 0.0
    %v903 = vmax.f32 %v879, 0.0
    %v904 = vmax.f32 %v884, 0.0
    %v905 = vmax.f32 %v887, 0.0
    %v906 = vld [vmem:[#allocation7] sm:$0xff]
    %v907 = vld [vmem:[#allocation7 + $0x8] sm:$0xff]
    %v908 = vld [vmem:[#allocation7 + $0x10] sm:$0xff]
    %v909 = vld [vmem:[#allocation7 + $0x18] sm:$0xff]
    %v910 = vld [vmem:[#allocation7 + $0x20] sm:$0xff]
    %v911 = vld [vmem:[#allocation7 + $0x28] sm:$0xff]
    %v912 = vld [vmem:[#allocation7 + $0x30] sm:$0xff]
    %v913 = vld [vmem:[#allocation7 + $0x38] sm:$0xff]
    %v914 = vld [vmem:[#allocation7 + $0x40] sm:$0xff]
    %v915 = vld [vmem:[#allocation7 + $0x48] sm:$0xff]
    %v916 = vld [vmem:[#allocation7 + $0x50] sm:$0xff]
    %v917 = vld [vmem:[#allocation7 + $0x58] sm:$0xff]
    %v918 = vld [vmem:[#allocation7 + $0x60] sm:$0xff]
    %v919 = vld [vmem:[#allocation7 + $0x68] sm:$0xff]
    %v920 = vld [vmem:[#allocation7 + $0x70] sm:$0xff]
    %v921 = vld [vmem:[#allocation7 + $0x78] sm:$0xff]
    %v922 = vld [vmem:[%s4] sm:$0x1]
    %v924 = vlaneseq
    %v925 = vshrl.u32 %v924, 7
    %v926 = vsub.s32 0, %v925
    %v927 = vrot.slane %v922, %v926
    %929 = vmatprep.subr.mxu0 0.0
    %930 = vmatpush1.msra.mxu0 %v921
    %931 = vmatprep.subr.mxu0 0.0
    %932 = vmatpush1.msra.mxu0 %v920
    %933 = vmatprep.subr.mxu0 0.0
    %934 = vmatpush1.msra.mxu0 %v919
    %935 = vmatprep.subr.mxu0 0.0
    %936 = vmatpush1.msra.mxu0 %v918
    %937 = vmatprep.subr.mxu0 0.0
    %938 = vmatpush1.msra.mxu0 %v917
    %939 = vmatprep.subr.mxu0 0.0
    %940 = vmatpush1.msra.mxu0 %v916
    %941 = vmatprep.subr.mxu0 0.0
    %942 = vmatpush1.msra.mxu0 %v915
    %943 = vmatprep.subr.mxu0 0.0
    %944 = vmatpush1.msra.mxu0 %v914
    %945 = vmatprep.subr.mxu0 0.0
    %946 = vmatpush1.msra.mxu0 %v913
    %947 = vmatprep.subr.mxu0 0.0
    %948 = vmatpush1.msra.mxu0 %v912
    %949 = vmatprep.subr.mxu0 0.0
    %950 = vmatpush1.msra.mxu0 %v911
    %951 = vmatprep.subr.mxu0 0.0
    %952 = vmatpush1.msra.mxu0 %v910
    %953 = vmatprep.subr.mxu0 0.0
    %954 = vmatpush1.msra.mxu0 %v909
    %955 = vmatprep.subr.mxu0 0.0
    %956 = vmatpush1.msra.mxu0 %v908
    %957 = vmatprep.subr.mxu0 0.0
    %958 = vmatpush1.msra.mxu0 %v907
    %959 = vmatprep.subr.mxu0 0.0
    %960 = vmatpush1.msra.mxu0 %v906
    %961 = vmatprep.subr.mxu0 0.0
    %962 = vmatpush2.msra.mxu0 0.0
    %963 = vmatprep.subr.mxu0 0.0
    %964 = vmatpush2.msra.mxu0 0.0
    %965 = vmatprep.subr.mxu0 0.0
    %966 = vmatpush2.msra.mxu0 0.0
    %967 = vmatprep.subr.mxu0 0.0
    %968 = vmatpush2.msra.mxu0 0.0
    %969 = vmatprep.subr.mxu0 0.0
    %970 = vmatpush2.msra.mxu0 0.0
    %971 = vmatprep.subr.mxu0 0.0
    %972 = vmatpush2.msra.mxu0 0.0
    %973 = vmatprep.subr.mxu0 0.0
    %974 = vmatpush2.msra.mxu0 0.0
    %975 = vmatprep.subr.mxu0 0.0
    %976 = vmatpush2.msra.mxu0 0.0
    %977 = vmatprep.subr.mxu0 0.0
    %978 = vmatpush2.msra.mxu0 0.0
    %979 = vmatprep.subr.mxu0 0.0
    %980 = vmatpush2.msra.mxu0 0.0
    %981 = vmatprep.subr.mxu0 0.0
    %982 = vmatpush2.msra.mxu0 0.0
    %983 = vmatprep.subr.mxu0 0.0
    %984 = vmatpush2.msra.mxu0 0.0
    %985 = vmatprep.subr.mxu0 0.0
    %986 = vmatpush2.msra.mxu0 0.0
    %987 = vmatprep.subr.mxu0 0.0
    %988 = vmatpush2.msra.mxu0 0.0
    %989 = vmatprep.subr.mxu0 0.0
    %990 = vmatpush2.msra.mxu0 0.0
    %991 = vmatprep.subr.mxu0 0.0
    %992 = vmatpush2.msra.mxu0 0.0
    %993 = vmatprep.mubr.f32.mxu0 0.0
    %994 = vmatmul.mubr.f32.gmra.mxu0 %v890
    %v995 = vpop.f32.mrf.mxu0
    %v996 = vadd.f32 %v927, %v995
    %v997 = vpop.f32.mrf.mxu0
    %998 = vmatprep.mubr.f32.mxu0 0.0
    %999 = vmatmul.mubr.f32.gmra.mxu0 %v891
    %v1000 = vpop.f32.mrf.mxu0
    %v1001 = vadd.f32 %v927, %v1000
    %v1002 = vpop.f32.mrf.mxu0
    %1003 = vmatprep.mubr.f32.mxu0 0.0
    %1004 = vmatmul.mubr.f32.gmra.mxu0 %v892
    %v1005 = vpop.f32.mrf.mxu0
    %v1006 = vadd.f32 %v927, %v1005
    %v1007 = vpop.f32.mrf.mxu0
    %1008 = vmatprep.mubr.f32.mxu0 0.0
    %1009 = vmatmul.mubr.f32.gmra.mxu0 %v893
    %v1010 = vpop.f32.mrf.mxu0
    %v1011 = vadd.f32 %v927, %v1010
    %v1012 = vpop.f32.mrf.mxu0
    %1013 = vmatprep.mubr.f32.mxu0 0.0
    %1014 = vmatmul.mubr.f32.gmra.mxu0 %v894
    %v1015 = vpop.f32.mrf.mxu0
    %v1016 = vadd.f32 %v927, %v1015
    %v1017 = vpop.f32.mrf.mxu0
    %1018 = vmatprep.mubr.f32.mxu0 0.0
    %1019 = vmatmul.mubr.f32.gmra.mxu0 %v895
    %v1020 = vpop.f32.mrf.mxu0
    %v1021 = vadd.f32 %v927, %v1020
    %v1022 = vpop.f32.mrf.mxu0
    %1023 = vmatprep.mubr.f32.mxu0 0.0
    %1024 = vmatmul.mubr.f32.gmra.mxu0 %v896
    %v1025 = vpop.f32.mrf.mxu0
    %v1026 = vadd.f32 %v927, %v1025
    %v1027 = vpop.f32.mrf.mxu0
    %1028 = vmatprep.mubr.f32.mxu0 0.0
    %1029 = vmatmul.mubr.f32.gmra.mxu0 %v897
    %v1030 = vpop.f32.mrf.mxu0
    %v1031 = vadd.f32 %v927, %v1030
    %v1032 = vpop.f32.mrf.mxu0
    %1033 = vmatprep.mubr.f32.mxu0 0.0
    %1034 = vmatmul.mubr.f32.gmra.mxu0 %v898
    %v1035 = vpop.f32.mrf.mxu0
    %v1036 = vadd.f32 %v927, %v1035
    %v1037 = vpop.f32.mrf.mxu0
    %1038 = vmatprep.mubr.f32.mxu0 0.0
    %1039 = vmatmul.mubr.f32.gmra.mxu0 %v899
    %v1040 = vpop.f32.mrf.mxu0
    %v1041 = vadd.f32 %v927, %v1040
    %v1042 = vpop.f32.mrf.mxu0
    %1043 = vmatprep.mubr.f32.mxu0 0.0
    %1044 = vmatmul.mubr.f32.gmra.mxu0 %v900
    %v1045 = vpop.f32.mrf.mxu0
    %v1046 = vadd.f32 %v927, %v1045
    %v1047 = vpop.f32.mrf.mxu0
    %1048 = vmatprep.mubr.f32.mxu0 0.0
    %1049 = vmatmul.mubr.f32.gmra.mxu0 %v901
    %v1050 = vpop.f32.mrf.mxu0
    %v1051 = vadd.f32 %v927, %v1050
    %v1052 = vpop.f32.mrf.mxu0
    %1053 = vmatprep.mubr.f32.mxu0 0.0
    %1054 = vmatmul.mubr.f32.gmra.mxu0 %v902
    %v1055 = vpop.f32.mrf.mxu0
    %v1056 = vadd.f32 %v927, %v1055
    %v1057 = vpop.f32.mrf.mxu0
    %1058 = vmatprep.mubr.f32.mxu0 0.0
    %1059 = vmatmul.mubr.f32.gmra.mxu0 %v903
    %v1060 = vpop.f32.mrf.mxu0
    %v1061 = vadd.f32 %v927, %v1060
    %v1062 = vpop.f32.mrf.mxu0
    %1063 = vmatprep.mubr.f32.mxu0 0.0
    %1064 = vmatmul.mubr.f32.gmra.mxu0 %v904
    %v1065 = vpop.f32.mrf.mxu0
    %v1066 = vadd.f32 %v927, %v1065
    %v1067 = vpop.f32.mrf.mxu0
    %1068 = vmatprep.mubr.f32.mxu0 0.0
    %1069 = vmatmul.mubr.f32.gmra.mxu0 %v905
    %v1070 = vpop.f32.mrf.mxu0
    %v1071 = vadd.f32 %v927, %v1070
    %v1072 = vpop.f32.mrf.mxu0
    %1073 = vdwg.mxu0
    %1074 = vst [vmem:[%s5] sm:$0xff] %v996
    %1075 = vst [vmem:[%s5 + $0x8] sm:$0xff] %v1001
    %1076 = vst [vmem:[%s5 + $0x10] sm:$0xff] %v1006
    %1077 = vst [vmem:[%s5 + $0x18] sm:$0xff] %v1011
    %1078 = vst [vmem:[%s5 + $0x20] sm:$0xff] %v1016
    %1079 = vst [vmem:[%s5 + $0x28] sm:$0xff] %v1021
    %1080 = vst [vmem:[%s5 + $0x30] sm:$0xff] %v1026
    %1081 = vst [vmem:[%s5 + $0x38] sm:$0xff] %v1031
    %1082 = vst [vmem:[%s5 + $0x40] sm:$0xff] %v1036
    %1083 = vst [vmem:[%s5 + $0x48] sm:$0xff] %v1041
    %1084 = vst [vmem:[%s5 + $0x50] sm:$0xff] %v1046
    %1085 = vst [vmem:[%s5 + $0x58] sm:$0xff] %v1051
    %1086 = vst [vmem:[%s5 + $0x60] sm:$0xff] %v1056
    %1087 = vst [vmem:[%s5 + $0x68] sm:$0xff] %v1061
    %1088 = vst [vmem:[%s5 + $0x70] sm:$0xff] %v1066
    %1089 = vst [vmem:[%s5 + $0x78] sm:$0xff] %v1071
    // Predicated region
    $region38: #{qnetwork_dueling_forward.1} parent=1 // pred_check
      _
    $region39: #{qnetwork_dueling_forward.1} parent=1 // pred_check_branch
      %1091 = sbr.rel (0) target = $region41
    $region40: #{qnetwork_dueling_forward.1} parent=1 // pred_region
      _
    $region41: #{qnetwork_dueling_forward.1} parent=1 // pred_fallthru
      _
    // Predicated region
    $region42: #{qnetwork_dueling_forward.1} parent=1 // pred_check
      _
    $region43: #{qnetwork_dueling_forward.1} parent=1 // pred_check_branch
      %1093 = sbr.rel (0) target = $region45
    $region44: #{qnetwork_dueling_forward.1} parent=1 // pred_region
      _
    $region45: #{qnetwork_dueling_forward.1} parent=1 // pred_fallthru
      _
    %1094 = vsyncpa [#allocation3], 1
    %1095 = vsyncpa [#allocation5], 1
    %1096 = vsyncpa [#allocation8], 1

</llo_original>
